<compile_context>
chip_gen: v6e
topology: v6e:2x2x1
jax: 0.10.0
libtpu: 0.0.40
codegen_flags: <defaults>
</compile_context>

<pallas_src>
import jax
import jax.numpy as jnp
from jax.experimental import pallas as pl
from jax.experimental.pallas import tpu as pltpu

Z_DIM = 2
X_DIM = 7
XR_W = 8                      # decoder output padded 7 -> 8
LAT_W = 2 * Z_DIM             # fused [ave | log_dev]
OUT_W = 128                   # lane-dense packed output width
PAD_W = OUT_W - (XR_W + Z_DIM + LAT_W)   # 114 zero columns
H1 = 384                      # 300 padded to lane multiple
H2 = 128                      # 100 padded to lane multiple


def _round_up(n, m):
    return ((n + m - 1) // m) * m


def _pad2(w, rows, cols):
    r, c = w.shape
    return jnp.pad(w, ((0, rows - r), (0, cols - c)))


def vae_kernel(x_ref, eps_ref,
               w1_ref, b1_ref, w2_ref, b2_ref, wlat_ref, blat_ref,
               dw1_ref, db1_ref, dw2_ref, db2_ref, dw3_ref, db3_ref,
               out_ref):
    x = x_ref[...]          # (tm, 7)
    eps = eps_ref[...]      # (tm, 2)

    # ---- Encoder ----
    # Layer 1 on the MXU (K=7, N=384); Mosaic pads the tiny K internally.
    h = jnp.dot(x, w1_ref[...], preferred_element_type=jnp.float32) + b1_ref[...]
    h = jnp.maximum(h, 0.0)                                   # (tm, 384)
    h = jnp.dot(h, w2_ref[...], preferred_element_type=jnp.float32) + b2_ref[...]
    h = jnp.maximum(h, 0.0)                                   # (tm, 128)
    # Fused latent projection: one (128, 4) dot -> [ave | log_dev].
    lat = jnp.dot(h, wlat_ref[...], preferred_element_type=jnp.float32) + blat_ref[...]
    ave = lat[:, :Z_DIM]
    log_dev = lat[:, Z_DIM:]

    # ---- Reparameterization: z = ave + exp(log_dev / 2) * eps ----
    z = ave + jnp.exp(log_dev * 0.5) * eps                    # (tm, 2)

    # ---- Decoder ----
    # Layer 1: contraction depth z_dim=2 -> two VPU broadcast-FMAs.
    dw1 = dw1_ref[...]
    d = z[:, 0:1] * dw1[0:1, :] + z[:, 1:2] * dw1[1:2, :] + db1_ref[...]
    d = jnp.maximum(d, 0.0)                                   # (tm, 128)
    d = jnp.dot(d, dw2_ref[...], preferred_element_type=jnp.float32) + db2_ref[...]
    d = jnp.maximum(d, 0.0)                                   # (tm, 384)
    logits = jnp.dot(d, dw3_ref[...], preferred_element_type=jnp.float32) + db3_ref[...]  # (tm, 8)
    # sigmoid via a single EUP tanh: sigmoid(x) = 0.5*(tanh(x/2)+1)
    xr = 0.5 * (jnp.tanh(0.5 * logits) + 1.0)

    # Lane-dense packed store: [xr | z | ave | log_dev | zeros] -> (tm, 128)
    pad = jnp.zeros((xr.shape[0], PAD_W), jnp.float32)
    out_ref[...] = jnp.concatenate([xr, z, lat, pad], axis=1)


def _batch_spec(feat, tm):
    return pl.BlockSpec((tm, feat), lambda i: (i, 0))


def _resident_spec(shape):
    # Full-array block with a constant index map: stays VMEM-resident across
    # grid steps (no re-DMA of weights per batch tile).
    return pl.BlockSpec(shape, lambda i: (0,) * len(shape))


def vae_forward(x, eps, params, *, batch_tile=512):
    """x: (B, 7) f32, eps: (B, z_dim) f32, params: dict of weights/biases.
    Returns (x_reconstructed, z, ave, log_dev)."""
    B = x.shape[0]
    # Batch tile: up to 512 rows per grid step; ensure >= 2 grid steps when
    # possible so the "parallel" batch axis can shard across v7x's two TCs.
    tm = min(batch_tile, _round_up(B, 8))
    bp = _round_up(B, tm)
    if bp // tm < 2 and bp > 8:
        tm = _round_up((bp + 1) // 2, 8)
        bp = _round_up(B, tm)
    if bp != B:
        pad = ((0, bp - B), (0, 0))
        x = jnp.pad(x, pad)
        eps = jnp.pad(eps, pad)

    # Wrapper-side weight prep (once per call): fuse the two latent heads and
    # zero-pad hidden dims 300->384, 100->128 so every intermediate is a full
    # (8,128) tile. Zero bias columns + zero downstream weight rows keep the
    # numerics identical to the unpadded network.
    w1 = _pad2(params["enc_w1"], X_DIM, H1)
    b1 = _pad2(params["enc_b1"], 1, H1)
    w2 = _pad2(params["enc_w2"], H1, H2)
    b2 = _pad2(params["enc_b2"], 1, H2)
    wlat = _pad2(jnp.concatenate([params["enc_wa"], params["enc_wv"]], axis=1), H2, LAT_W)
    blat = jnp.concatenate([params["enc_ba"], params["enc_bv"]], axis=1)
    dw1 = _pad2(params["dec_w1"], Z_DIM, H2)
    db1 = _pad2(params["dec_b1"], 1, H2)
    dw2 = _pad2(params["dec_w2"], H2, H1)
    db2 = _pad2(params["dec_b2"], 1, H1)
    dw3 = _pad2(params["dec_w3"], H1, XR_W)
    db3 = _pad2(params["dec_b3"], 1, XR_W)

    weights = (w1, b1, w2, b2, wlat, blat, dw1, db1, dw2, db2, dw3, db3)

    in_specs = [_batch_spec(X_DIM, tm), _batch_spec(Z_DIM, tm)]
    in_specs += [_resident_spec(w.shape) for w in weights]

    out = pl.pallas_call(
        vae_kernel,
        out_shape=jax.ShapeDtypeStruct((bp, OUT_W), jnp.float32),
        grid_spec=pltpu.PrefetchScalarGridSpec(
            num_scalar_prefetch=0,
            grid=(bp // tm,),
            in_specs=in_specs,
            out_specs=pl.BlockSpec((tm, OUT_W), lambda i: (i, 0)),
        ),
        compiler_params=pltpu.CompilerParams(
            dimension_semantics=("parallel",),
        ),
    )(x, eps, *weights)

    xr = out[:B, :X_DIM]
    z = out[:B, XR_W:XR_W + Z_DIM]
    ave = out[:B, XR_W + Z_DIM:XR_W + 2 * Z_DIM]
    log_dev = out[:B, XR_W + 2 * Z_DIM:XR_W + 3 * Z_DIM]
    return xr, z, ave, log_dev


def init_params(key):
    """Deterministic synthetic init matching nn.Linear shapes.
    Weights stored as (in_features, out_features); biases as (1, out_features)."""
    dims = {
        "enc_w1": (7, 300),     "enc_b1": (1, 300),
        "enc_w2": (300, 100),   "enc_b2": (1, 100),
        "enc_wa": (100, Z_DIM), "enc_ba": (1, Z_DIM),
        "enc_wv": (100, Z_DIM), "enc_bv": (1, Z_DIM),
        "dec_w1": (Z_DIM, 100), "dec_b1": (1, 100),
        "dec_w2": (100, 300),   "dec_b2": (1, 300),
        "dec_w3": (300, 7),     "dec_b3": (1, 7),
    }
    params = {}
    keys = jax.random.split(key, len(dims))
    for k, (name, shape) in zip(keys, dims.items()):
        scale = 1.0 / (max(shape[0], 1) ** 0.5)
        params[name] = scale * jax.random.normal(k, shape, dtype=jnp.float32)
    return params


def reference_forward(x, eps, p):
    """Plain-JAX reference (unpadded weights) for sanity checking the kernel."""
    h = jnp.maximum(x @ p["enc_w1"] + p["enc_b1"], 0.0)
    h = jnp.maximum(h @ p["enc_w2"] + p["enc_b2"], 0.0)
    ave = h @ p["enc_wa"] + p["enc_ba"]
    log_dev = h @ p["enc_wv"] + p["enc_bv"]
    z = ave + jnp.exp(log_dev / 2.0) * eps
    d = jnp.maximum(z @ p["dec_w1"] + p["dec_b1"], 0.0)
    d = jnp.maximum(d @ p["dec_w2"] + p["dec_b2"], 0.0)
    xr = jax.nn.sigmoid(d @ p["dec_w3"] + p["dec_b3"])
    return xr, z, ave, log_dev


def _check(batch, k_param, seed):
    k_x, k_eps = jax.random.split(jax.random.PRNGKey(seed), 2)
    x = jax.random.normal(k_x, (batch, X_DIM), dtype=jnp.float32)
    eps = jax.random.normal(k_eps, (batch, Z_DIM), dtype=jnp.float32)
    params = init_params(k_param)

    outs = vae_forward(x, eps, params)
    outs = jax.block_until_ready(outs)

    refs = reference_forward(x, eps, params)
    for o, r in zip(outs, refs):
        assert o.shape == r.shape and o.dtype == r.dtype
        assert jnp.max(jnp.abs(o - r)) < 2e-4, "kernel mismatch vs reference"


if __name__ == "__main__":
    key = jax.random.PRNGKey(0)
    k_param, _ = jax.random.split(key, 2)

    # Small batch (tiny single/dual-step grid) and a larger batch that
    # exercises batch padding + a multi-step pipelined "parallel" grid.
    _check(batch=8, k_param=k_param, seed=1)
    _check(batch=300, k_param=k_param, seed=2)

    print("KERNEL_OK")
</pallas_src>

<mosaic_0001>
module attributes {stable_mosaic.version = 11 : i64} {
  func.func @vae_kernel(%arg0: i32, %arg1: memref<8x7xf32, #tpu.memory_space<vmem>>, %arg2: memref<8x2xf32, #tpu.memory_space<vmem>>, %arg3: memref<7x384xf32, #tpu.memory_space<vmem>>, %arg4: memref<1x384xf32, #tpu.memory_space<vmem>>, %arg5: memref<384x128xf32, #tpu.memory_space<vmem>>, %arg6: memref<1x128xf32, #tpu.memory_space<vmem>>, %arg7: memref<128x4xf32, #tpu.memory_space<vmem>>, %arg8: memref<1x4xf32, #tpu.memory_space<vmem>>, %arg9: memref<2x128xf32, #tpu.memory_space<vmem>>, %arg10: memref<1x128xf32, #tpu.memory_space<vmem>>, %arg11: memref<128x384xf32, #tpu.memory_space<vmem>>, %arg12: memref<1x384xf32, #tpu.memory_space<vmem>>, %arg13: memref<384x8xf32, #tpu.memory_space<vmem>>, %arg14: memref<1x8xf32, #tpu.memory_space<vmem>>, %arg15: memref<8x128xf32, #tpu.memory_space<vmem>>) attributes {dimension_semantics = [#tpu.dimension_semantics<parallel>], iteration_bounds = array<i64: 1>, scalar_prefetch = 0 : i64, scratch_operands = 0 : i64, tpu.core_type = #tpu.core_type<tc>, window_params = [{transform_indices = @transform_0, window_bounds = array<i64: 8, 7>}, {transform_indices = @transform_1, window_bounds = array<i64: 8, 2>}, {pipeline_mode = #tpu.pipeline_mode<synchronous>, transform_indices = @transform_2, window_bounds = array<i64: 7, 384>}, {pipeline_mode = #tpu.pipeline_mode<synchronous>, transform_indices = @transform_3, window_bounds = array<i64: 1, 384>}, {pipeline_mode = #tpu.pipeline_mode<synchronous>, transform_indices = @transform_4, window_bounds = array<i64: 384, 128>}, {pipeline_mode = #tpu.pipeline_mode<synchronous>, transform_indices = @transform_5, window_bounds = array<i64: 1, 128>}, {pipeline_mode = #tpu.pipeline_mode<synchronous>, transform_indices = @transform_6, window_bounds = array<i64: 128, 4>}, {pipeline_mode = #tpu.pipeline_mode<synchronous>, transform_indices = @transform_7, window_bounds = array<i64: 1, 4>}, {pipeline_mode = #tpu.pipeline_mode<synchronous>, transform_indices = @transform_8, window_bounds = array<i64: 2, 128>}, {pipeline_mode = #tpu.pipeline_mode<synchronous>, transform_indices = @transform_9, window_bounds = array<i64: 1, 128>}, {pipeline_mode = #tpu.pipeline_mode<synchronous>, transform_indices = @transform_10, window_bounds = array<i64: 128, 384>}, {pipeline_mode = #tpu.pipeline_mode<synchronous>, transform_indices = @transform_11, window_bounds = array<i64: 1, 384>}, {pipeline_mode = #tpu.pipeline_mode<synchronous>, transform_indices = @transform_12, window_bounds = array<i64: 384, 8>}, {pipeline_mode = #tpu.pipeline_mode<synchronous>, transform_indices = @transform_13, window_bounds = array<i64: 1, 8>}, {transform_indices = @transform_14, window_bounds = array<i64: 8, 128>}]} {
    %c0 = arith.constant 0 : index
    %c0_0 = arith.constant 0 : index
    %0 = vector.load %arg1[%c0, %c0_0] : memref<8x7xf32, #tpu.memory_space<vmem>>, vector<8x7xf32>
    %c0_1 = arith.constant 0 : index
    %c0_2 = arith.constant 0 : index
    %1 = vector.load %arg2[%c0_1, %c0_2] : memref<8x2xf32, #tpu.memory_space<vmem>>, vector<8x2xf32>
    %c0_3 = arith.constant 0 : index
    %c0_4 = arith.constant 0 : index
    %2 = vector.load %arg3[%c0_3, %c0_4] : memref<7x384xf32, #tpu.memory_space<vmem>>, vector<7x384xf32>
    %cst = arith.constant dense<0.000000e+00> : vector<8x384xf32>
    %3 = tpu.matmul %0, %2, %cst {dimension_numbers = #tpu.dot_dimension_numbers<[1], [0], [0], [1], [0, 0, 1, 1], [], []>} : vector<8x7xf32>, vector<7x384xf32>, vector<8x384xf32> -> vector<8x384xf32>
    %c0_5 = arith.constant 0 : index
    %c0_6 = arith.constant 0 : index
    %4 = vector.load %arg4[%c0_5, %c0_6] : memref<1x384xf32, #tpu.memory_space<vmem>>, vector<1x384xf32>
    %5 = vector.broadcast %4 : vector<1x384xf32> to vector<8x384xf32>
    %6 = arith.addf %3, %5 : vector<8x384xf32>
    %cst_7 = arith.constant 0.000000e+00 : f32
    %7 = vector.broadcast %cst_7 : f32 to vector<8x384xf32>
    %8 = arith.maximumf %6, %7 : vector<8x384xf32>
    %c0_8 = arith.constant 0 : index
    %c0_9 = arith.constant 0 : index
    %9 = vector.load %arg5[%c0_8, %c0_9] : memref<384x128xf32, #tpu.memory_space<vmem>>, vector<384x128xf32>
    %cst_10 = arith.constant dense<0.000000e+00> : vector<8x128xf32>
    %10 = tpu.matmul %8, %9, %cst_10 {dimension_numbers = #tpu.dot_dimension_numbers<[1], [0], [0], [1], [0, 0, 1, 1], [], []>} : vector<8x384xf32>, vector<384x128xf32>, vector<8x128xf32> -> vector<8x128xf32>
    %c0_11 = arith.constant 0 : index
    %c0_12 = arith.constant 0 : index
    %11 = vector.load %arg6[%c0_11, %c0_12] : memref<1x128xf32, #tpu.memory_space<vmem>>, vector<1x128xf32>
    %12 = vector.broadcast %11 : vector<1x128xf32> to vector<8x128xf32>
    %13 = arith.addf %10, %12 : vector<8x128xf32>
    %cst_13 = arith.constant 0.000000e+00 : f32
    %14 = vector.broadcast %cst_13 : f32 to vector<8x128xf32>
    %15 = arith.maximumf %13, %14 : vector<8x128xf32>
    %c0_14 = arith.constant 0 : index
    %c0_15 = arith.constant 0 : index
    %16 = vector.load %arg7[%c0_14, %c0_15] : memref<128x4xf32, #tpu.memory_space<vmem>>, vector<128x4xf32>
    %cst_16 = arith.constant dense<0.000000e+00> : vector<8x4xf32>
    %17 = tpu.matmul %15, %16, %cst_16 {dimension_numbers = #tpu.dot_dimension_numbers<[1], [0], [0], [1], [0, 0, 1, 1], [], []>} : vector<8x128xf32>, vector<128x4xf32>, vector<8x4xf32> -> vector<8x4xf32>
    %c0_17 = arith.constant 0 : index
    %c0_18 = arith.constant 0 : index
    %18 = vector.load %arg8[%c0_17, %c0_18] : memref<1x4xf32, #tpu.memory_space<vmem>>, vector<1x4xf32>
    %19 = vector.broadcast %18 : vector<1x4xf32> to vector<8x4xf32>
    %20 = arith.addf %17, %19 : vector<8x4xf32>
    %21 = vector.extract_strided_slice %20 {offsets = [0, 0], sizes = [8, 2], strides = [1, 1]} : vector<8x4xf32> to vector<8x2xf32>
    %22 = vector.extract_strided_slice %20 {offsets = [0, 2], sizes = [8, 2], strides = [1, 1]} : vector<8x4xf32> to vector<8x2xf32>
    %cst_19 = arith.constant 5.000000e-01 : f32
    %23 = vector.broadcast %cst_19 : f32 to vector<8x2xf32>
    %24 = arith.mulf %22, %23 : vector<8x2xf32>
    %25 = math.exp %24 : vector<8x2xf32>
    %26 = arith.mulf %25, %1 : vector<8x2xf32>
    %27 = arith.addf %21, %26 : vector<8x2xf32>
    %c0_20 = arith.constant 0 : index
    %c0_21 = arith.constant 0 : index
    %28 = vector.load %arg9[%c0_20, %c0_21] : memref<2x128xf32, #tpu.memory_space<vmem>>, vector<2x128xf32>
    %29 = vector.extract_strided_slice %27 {offsets = [0, 0], sizes = [8, 1], strides = [1, 1]} : vector<8x2xf32> to vector<8x1xf32>
    %30 = vector.extract_strided_slice %28 {offsets = [0, 0], sizes = [1, 128], strides = [1, 1]} : vector<2x128xf32> to vector<1x128xf32>
    %31 = vector.broadcast %29 : vector<8x1xf32> to vector<8x128xf32>
    %32 = vector.broadcast %30 : vector<1x128xf32> to vector<8x128xf32>
    %33 = arith.mulf %31, %32 : vector<8x128xf32>
    %34 = vector.extract_strided_slice %27 {offsets = [0, 1], sizes = [8, 1], strides = [1, 1]} : vector<8x2xf32> to vector<8x1xf32>
    %35 = vector.extract_strided_slice %28 {offsets = [1, 0], sizes = [1, 128], strides = [1, 1]} : vector<2x128xf32> to vector<1x128xf32>
    %36 = vector.broadcast %34 : vector<8x1xf32> to vector<8x128xf32>
    %37 = vector.broadcast %35 : vector<1x128xf32> to vector<8x128xf32>
    %38 = arith.mulf %36, %37 : vector<8x128xf32>
    %39 = arith.addf %33, %38 : vector<8x128xf32>
    %c0_22 = arith.constant 0 : index
    %c0_23 = arith.constant 0 : index
    %40 = vector.load %arg10[%c0_22, %c0_23] : memref<1x128xf32, #tpu.memory_space<vmem>>, vector<1x128xf32>
    %41 = vector.broadcast %40 : vector<1x128xf32> to vector<8x128xf32>
    %42 = arith.addf %39, %41 : vector<8x128xf32>
    %cst_24 = arith.constant 0.000000e+00 : f32
    %43 = vector.broadcast %cst_24 : f32 to vector<8x128xf32>
    %44 = arith.maximumf %42, %43 : vector<8x128xf32>
    %c0_25 = arith.constant 0 : index
    %c0_26 = arith.constant 0 : index
    %45 = vector.load %arg11[%c0_25, %c0_26] : memref<128x384xf32, #tpu.memory_space<vmem>>, vector<128x384xf32>
    %cst_27 = arith.constant dense<0.000000e+00> : vector<8x384xf32>
    %46 = tpu.matmul %44, %45, %cst_27 {dimension_numbers = #tpu.dot_dimension_numbers<[1], [0], [0], [1], [0, 0, 1, 1], [], []>} : vector<8x128xf32>, vector<128x384xf32>, vector<8x384xf32> -> vector<8x384xf32>
    %c0_28 = arith.constant 0 : index
    %c0_29 = arith.constant 0 : index
    %47 = vector.load %arg12[%c0_28, %c0_29] : memref<1x384xf32, #tpu.memory_space<vmem>>, vector<1x384xf32>
    %48 = vector.broadcast %47 : vector<1x384xf32> to vector<8x384xf32>
    %49 = arith.addf %46, %48 : vector<8x384xf32>
    %cst_30 = arith.constant 0.000000e+00 : f32
    %50 = vector.broadcast %cst_30 : f32 to vector<8x384xf32>
    %51 = arith.maximumf %49, %50 : vector<8x384xf32>
    %c0_31 = arith.constant 0 : index
    %c0_32 = arith.constant 0 : index
    %52 = vector.load %arg13[%c0_31, %c0_32] : memref<384x8xf32, #tpu.memory_space<vmem>>, vector<384x8xf32>
    %cst_33 = arith.constant dense<0.000000e+00> : vector<8x8xf32>
    %53 = tpu.matmul %51, %52, %cst_33 {dimension_numbers = #tpu.dot_dimension_numbers<[1], [0], [0], [1], [0, 0, 1, 1], [], []>} : vector<8x384xf32>, vector<384x8xf32>, vector<8x8xf32> -> vector<8x8xf32>
    %c0_34 = arith.constant 0 : index
    %c0_35 = arith.constant 0 : index
    %54 = vector.load %arg14[%c0_34, %c0_35] : memref<1x8xf32, #tpu.memory_space<vmem>>, vector<1x8xf32>
    %55 = vector.broadcast %54 : vector<1x8xf32> to vector<8x8xf32>
    %56 = arith.addf %53, %55 : vector<8x8xf32>
    %cst_36 = arith.constant 5.000000e-01 : f32
    %57 = vector.broadcast %cst_36 : f32 to vector<8x8xf32>
    %58 = arith.mulf %57, %56 : vector<8x8xf32>
    %59 = math.tanh %58 : vector<8x8xf32>
    %cst_37 = arith.constant 1.000000e+00 : f32
    %60 = vector.broadcast %cst_37 : f32 to vector<8x8xf32>
    %61 = arith.addf %59, %60 : vector<8x8xf32>
    %cst_38 = arith.constant 5.000000e-01 : f32
    %62 = vector.broadcast %cst_38 : f32 to vector<8x8xf32>
    %63 = arith.mulf %62, %61 : vector<8x8xf32>
    %cst_39 = arith.constant 0.000000e+00 : f32
    %64 = vector.broadcast %cst_39 : f32 to vector<8x114xf32>
    %65 = tpu.concatenate %63, %27, %20, %64 in 1 : vector<8x8xf32>, vector<8x2xf32>, vector<8x4xf32>, vector<8x114xf32> -> vector<8x128xf32>
    %c0_40 = arith.constant 0 : index
    %c0_41 = arith.constant 0 : index
    %66 = vector.load %arg15[%c0_40, %c0_41] : memref<8x128xf32, #tpu.memory_space<vmem>>, vector<8x128xf32>
    tpu.vector_store %arg15[%c0_40, %c0_41], %65 {strides = array<i32>} : memref<8x128xf32, #tpu.memory_space<vmem>>, vector<8x128xf32>,
    return
  }
  func.func @transform_0(%arg0: i32) -> (i32, i32) {
    %c0_i32 = arith.constant 0 : i32
    %c0_i32_0 = arith.constant 0 : i32
    return %arg0, %c0_i32 : i32, i32
  }
  func.func @transform_1(%arg0: i32) -> (i32, i32) {
    %c0_i32 = arith.constant 0 : i32
    %c0_i32_0 = arith.constant 0 : i32
    return %arg0, %c0_i32 : i32, i32
  }
  func.func @transform_2(%arg0: i32) -> (i32, i32) {
    %c0_i32 = arith.constant 0 : i32
    %c0_i32_0 = arith.constant 0 : i32
    %c0_i32_1 = arith.constant 0 : i32
    return %c0_i32, %c0_i32_0 : i32, i32
  }
  func.func @transform_3(%arg0: i32) -> (i32, i32) {
    %c0_i32 = arith.constant 0 : i32
    %c0_i32_0 = arith.constant 0 : i32
    %c0_i32_1 = arith.constant 0 : i32
    return %c0_i32, %c0_i32_0 : i32, i32
  }
  func.func @transform_4(%arg0: i32) -> (i32, i32) {
    %c0_i32 = arith.constant 0 : i32
    %c0_i32_0 = arith.constant 0 : i32
    %c0_i32_1 = arith.constant 0 : i32
    return %c0_i32, %c0_i32_0 : i32, i32
  }
  func.func @transform_5(%arg0: i32) -> (i32, i32) {
    %c0_i32 = arith.constant 0 : i32
    %c0_i32_0 = arith.constant 0 : i32
    %c0_i32_1 = arith.constant 0 : i32
    return %c0_i32, %c0_i32_0 : i32, i32
  }
  func.func @transform_6(%arg0: i32) -> (i32, i32) {
    %c0_i32 = arith.constant 0 : i32
    %c0_i32_0 = arith.constant 0 : i32
    %c0_i32_1 = arith.constant 0 : i32
    return %c0_i32, %c0_i32_0 : i32, i32
  }
  func.func @transform_7(%arg0: i32) -> (i32, i32) {
    %c0_i32 = arith.constant 0 : i32
    %c0_i32_0 = arith.constant 0 : i32
    %c0_i32_1 = arith.constant 0 : i32
    return %c0_i32, %c0_i32_0 : i32, i32
  }
  func.func @transform_8(%arg0: i32) -> (i32, i32) {
    %c0_i32 = arith.constant 0 : i32
    %c0_i32_0 = arith.constant 0 : i32
    %c0_i32_1 = arith.constant 0 : i32
    return %c0_i32, %c0_i32_0 : i32, i32
  }
  func.func @transform_9(%arg0: i32) -> (i32, i32) {
    %c0_i32 = arith.constant 0 : i32
    %c0_i32_0 = arith.constant 0 : i32
    %c0_i32_1 = arith.constant 0 : i32
    return %c0_i32, %c0_i32_0 : i32, i32
  }
  func.func @transform_10(%arg0: i32) -> (i32, i32) {
    %c0_i32 = arith.constant 0 : i32
    %c0_i32_0 = arith.constant 0 : i32
    %c0_i32_1 = arith.constant 0 : i32
    return %c0_i32, %c0_i32_0 : i32, i32
  }
  func.func @transform_11(%arg0: i32) -> (i32, i32) {
    %c0_i32 = arith.constant 0 : i32
    %c0_i32_0 = arith.constant 0 : i32
    %c0_i32_1 = arith.constant 0 : i32
    return %c0_i32, %c0_i32_0 : i32, i32
  }
  func.func @transform_12(%arg0: i32) -> (i32, i32) {
    %c0_i32 = arith.constant 0 : i32
    %c0_i32_0 = arith.constant 0 : i32
    %c0_i32_1 = arith.constant 0 : i32
    return %c0_i32, %c0_i32_0 : i32, i32
  }
  func.func @transform_13(%arg0: i32) -> (i32, i32) {
    %c0_i32 = arith.constant 0 : i32
    %c0_i32_0 = arith.constant 0 : i32
    %c0_i32_1 = arith.constant 0 : i32
    return %c0_i32, %c0_i32_0 : i32, i32
  }
  func.func @transform_14(%arg0: i32) -> (i32, i32) {
    %c0_i32 = arith.constant 0 : i32
    %c0_i32_0 = arith.constant 0 : i32
    return %arg0, %c0_i32 : i32, i32
  }
}

</mosaic_0001>

<llo_original>
// kernel: tpu_custom_call.1
$region0: #{tpu_custom_call.1}
  #allocation0 [shape = 'u32[]', space=smem, size = 0x4, offset = 0x4, fixed_abs, tag = 'smem constant byte address 0x4 - core index']
  #allocation1 [shape = 'u32[144,128]{1,0:T(1,128)}', space=vmem, size = 0x12000, scoped, tag = 'internal scratch']
  %s0 = inlined_call_operand.vmem [shape: f32[8,7], index: 0, kind: input, shape index: {}]
  %s1 = inlined_call_operand.vmem [shape: f32[8,2], index: 1, kind: input, shape index: {}]
  %s2 = inlined_call_operand.vmem [shape: f32[7,384], index: 2, kind: input, shape index: {}]
  %s3 = inlined_call_operand.vmem [shape: f32[1,384], index: 3, kind: input, shape index: {}]
  %s4 = inlined_call_operand.vmem [shape: f32[384,128], index: 4, kind: input, shape index: {}]
  %s5 = inlined_call_operand.vmem [shape: f32[1,128], index: 5, kind: input, shape index: {}]
  %s6 = inlined_call_operand.vmem [shape: f32[128,4], index: 6, kind: input, shape index: {}]
  %s7 = inlined_call_operand.vmem [shape: f32[1,4], index: 7, kind: input, shape index: {}]
  %s8 = inlined_call_operand.vmem [shape: f32[2,128], index: 8, kind: input, shape index: {}]
  %s9 = inlined_call_operand.vmem [shape: f32[1,128], index: 9, kind: input, shape index: {}]
  %s10 = inlined_call_operand.hbm [shape: f32[128,384], index: 10, kind: input, shape index: {}]
  %s11 = inlined_call_operand.vmem [shape: f32[1,384], index: 11, kind: input, shape index: {}]
  %s12 = inlined_call_operand.vmem [shape: f32[384,8], index: 12, kind: input, shape index: {}]
  %s13 = inlined_call_operand.vmem [shape: f32[1,8], index: 13, kind: input, shape index: {}]
  %s14 = inlined_call_operand.hbm [shape: f32[8,128], index: 14, kind: output, shape index: {}]
  %s15 = sld [smem:[#allocation0]]
  $region70: #{tpu_custom_call.1} parent=0
    _
  %s17 = ssub.s32 1, %s15
  %s18 = scalar_select 0, %s17, %s15
  $region1: #{tpu_custom_call.1} parent=0
    #allocation2 [shape = 'u8[196608]{0}', space=vmem, size = 0x30000, scoped, tag = 'input window, operand 10, single buffered']
    #allocation3 [shape = 's32[1]{0}', space=sflag, size = 0x4, scoped, tag = 'scoped memory for tpu_custom_call.1']
    #allocation4 [shape = 's32[1]{0}', space=sflag, size = 0x4, scoped, tag = 'scoped memory for tpu_custom_call.1']
    #allocation5 [shape = 'u8[4096]{0}', space=vmem, size = 0x1000, scoped, tag = 'output window, operand 0, single buffered']
    %19 = vsyncpa [#allocation3], 0
    %20 = vsyncpa [#allocation4], 0
    // Predicated region
    $region2: #{tpu_custom_call.1} parent=1 // pred_check
      _
    $region3: #{tpu_custom_call.1} parent=1 // pred_check_branch
      %22 = sbr.rel (0) target = $region5
    $region4: #{tpu_custom_call.1} parent=1 // pred_region
      _
    $region5: #{tpu_custom_call.1} parent=1 // pred_fallthru
      _
    // Predicated region
    $region6: #{tpu_custom_call.1} parent=1 // pred_check
      _
    $region7: #{tpu_custom_call.1} parent=1 // pred_check_branch
      %24 = sbr.rel (0) target = $region9
    $region8: #{tpu_custom_call.1} parent=1 // pred_region
      _
    $region9: #{tpu_custom_call.1} parent=1 // pred_fallthru
      _
    // Predicated region
    $region10: #{tpu_custom_call.1} parent=1 // pred_check
      _
    $region11: #{tpu_custom_call.1} parent=1 // pred_check_branch
      %26 = sbr.rel (0) target = $region13
    $region12: #{tpu_custom_call.1} parent=1 // pred_region
      _
    $region13: #{tpu_custom_call.1} parent=1 // pred_fallthru
      _
    // Predicated region
    $region14: #{tpu_custom_call.1} parent=1 // pred_check
      _
    $region15: #{tpu_custom_call.1} parent=1 // pred_check_branch
      %28 = sbr.rel (0) target = $region17
    $region16: #{tpu_custom_call.1} parent=1 // pred_region
      _
    $region17: #{tpu_custom_call.1} parent=1 // pred_fallthru
      _
    // Predicated region
    $region18: #{tpu_custom_call.1} parent=1 // pred_check
      _
    $region19: #{tpu_custom_call.1} parent=1 // pred_check_branch
      %30 = sbr.rel (0) target = $region21
    $region20: #{tpu_custom_call.1} parent=1 // pred_region
      _
    $region21: #{tpu_custom_call.1} parent=1 // pred_fallthru
      _
    // Predicated region
    $region22: #{tpu_custom_call.1} parent=1 // pred_check
      _
    $region23: #{tpu_custom_call.1} parent=1 // pred_check_branch
      %32 = sbr.rel (0) target = $region25
    $region24: #{tpu_custom_call.1} parent=1 // pred_region
      _
    $region25: #{tpu_custom_call.1} parent=1 // pred_fallthru
      _
    // Predicated region
    $region26: #{tpu_custom_call.1} parent=1 // pred_check
      _
    $region27: #{tpu_custom_call.1} parent=1 // pred_check_branch
      %34 = sbr.rel (0) target = $region29
    $region28: #{tpu_custom_call.1} parent=1 // pred_region
      _
    $region29: #{tpu_custom_call.1} parent=1 // pred_fallthru
      _
    // Predicated region
    $region30: #{tpu_custom_call.1} parent=1 // pred_check
      _
    $region31: #{tpu_custom_call.1} parent=1 // pred_check_branch
      %36 = sbr.rel (0) target = $region33
    $region32: #{tpu_custom_call.1} parent=1 // pred_region
      _
    $region33: #{tpu_custom_call.1} parent=1 // pred_fallthru
      _
    // Predicated region
    $region34: #{tpu_custom_call.1} parent=1 // pred_check
      _
    $region35: #{tpu_custom_call.1} parent=1 // pred_check_branch
      %38 = sbr.rel (0) target = $region37
    $region36: #{tpu_custom_call.1} parent=1 // pred_region
      _
    $region37: #{tpu_custom_call.1} parent=1 // pred_fallthru
      _
    // Predicated region
    $region38: #{tpu_custom_call.1} parent=1 // pred_check
      _
    $region39: #{tpu_custom_call.1} parent=1 // pred_check_branch
      %40 = sbr.rel (0) target = $region41
    $region40: #{tpu_custom_call.1} parent=1 // pred_region
      _
    $region41: #{tpu_custom_call.1} parent=1 // pred_fallthru
      _
    // Predicated region
    $region42: #{tpu_custom_call.1} parent=1 // pred_check
      _
    $region43: #{tpu_custom_call.1} parent=1 // pred_check_branch
      %42 = sbr.rel (0) target = $region45
    $region44: #{tpu_custom_call.1} parent=1 // pred_region
      %s44 = ssub.s32 6144, 6144
      %45 = vsyncadd [#allocation3], %s44
      %s46 = sshll.u32 [#allocation2], 4
      %s47 = int_to_ptr.vmem [resolvable:$true] %s46
      %52 = dma.hbm_to_vmem [thread:$0]  %s10, 6144, %s47, [#allocation3], 384, 384, 24
    $region45: #{tpu_custom_call.1} parent=1 // pred_fallthru
      _
    // Predicated region
    $region46: #{tpu_custom_call.1} parent=1 // pred_check
      _
    $region47: #{tpu_custom_call.1} parent=1 // pred_check_branch
      %54 = sbr.rel (0) target = $region49
    $region48: #{tpu_custom_call.1} parent=1 // pred_region
      _
    $region49: #{tpu_custom_call.1} parent=1 // pred_fallthru
      _
    // Predicated region
    $region50: #{tpu_custom_call.1} parent=1 // pred_check
      _
    $region51: #{tpu_custom_call.1} parent=1 // pred_check_branch
      %56 = sbr.rel (0) target = $region53
    $region52: #{tpu_custom_call.1} parent=1 // pred_region
      _
    $region53: #{tpu_custom_call.1} parent=1 // pred_fallthru
      _
    // Predicated region
    $region54: #{tpu_custom_call.1} parent=1 // pred_check
      _
    $region55: #{tpu_custom_call.1} parent=1 // pred_check_branch
      %58 = sbr.rel (0) target = $region57
    $region56: #{tpu_custom_call.1} parent=1 // pred_region
      _
    $region57: #{tpu_custom_call.1} parent=1 // pred_fallthru
      _
    // Predicated region
    $region58: #{tpu_custom_call.1} parent=1 // pred_check
      _
    $region59: #{tpu_custom_call.1} parent=1 // pred_check_branch
      %60 = sbr.rel (0) target = $region61
    $region60: #{tpu_custom_call.1} parent=1 // pred_region
      %61 = dma.done [#allocation3], 6144
    $region61: #{tpu_custom_call.1} parent=1 // pred_fallthru
      _
    %v62 = vld [vmem:[%s0] sm:$0xff]
    %v63 = vld [vmem:[%s1] sm:$0xff]
    %v64 = vld [vmem:[%s2] sm:$0x7f]
    %v65 = vld [vmem:[%s2 + $0x8] sm:$0x7f]
    %v66 = vld [vmem:[%s2 + $0x10] sm:$0x7f]
    %v67 = vld [vmem:[%s3] sm:$0x7]
    %v69 = vlaneseq
    %v70 = vshrl.u32 %v69, 7
    %v71 = vsub.s32 0, %v70
    %v72 = vrot.slane %v67, %v71
    %v73 = vlaneseq
    %v74 = vshrl.u32 %v73, 7
    %v75 = vsub.s32 1, %v74
    %v76 = vrot.slane %v67, %v75
    %v77 = vlaneseq
    %v78 = vshrl.u32 %v77, 7
    %v79 = vsub.s32 2, %v78
    %v80 = vrot.slane %v67, %v79
    %vm84 = vcmask 56320
    %v86 = vsel %vm84, %v62, 0
    %vm88 = vcmask 1046528
    %v90 = vsel %vm88, %v64, 0
    %v93 = vsel %vm88, %v65, 0
    %v96 = vsel %vm88, %v66, 0
    %98 = vmatprep.subr.mxu0 0.0
    %99 = vmatpush1.msra.mxu0 0.0
    %100 = vmatprep.subr.mxu0 0.0
    %101 = vmatpush1.msra.mxu0 0.0
    %102 = vmatprep.subr.mxu0 0.0
    %103 = vmatpush1.msra.mxu0 0.0
    %104 = vmatprep.subr.mxu0 0.0
    %105 = vmatpush1.msra.mxu0 0.0
    %106 = vmatprep.subr.mxu0 0.0
    %107 = vmatpush1.msra.mxu0 0.0
    %108 = vmatprep.subr.mxu0 0.0
    %109 = vmatpush1.msra.mxu0 0.0
    %110 = vmatprep.subr.mxu0 0.0
    %111 = vmatpush1.msra.mxu0 0.0
    %112 = vmatprep.subr.mxu0 0.0
    %113 = vmatpush1.msra.mxu0 0.0
    %114 = vmatprep.subr.mxu0 0.0
    %115 = vmatpush1.msra.mxu0 0.0
    %116 = vmatprep.subr.mxu0 0.0
    %117 = vmatpush1.msra.mxu0 0.0
    %118 = vmatprep.subr.mxu0 0.0
    %119 = vmatpush1.msra.mxu0 0.0
    %120 = vmatprep.subr.mxu0 0.0
    %121 = vmatpush1.msra.mxu0 0.0
    %122 = vmatprep.subr.mxu0 0.0
    %123 = vmatpush1.msra.mxu0 0.0
    %124 = vmatprep.subr.mxu0 0.0
    %125 = vmatpush1.msra.mxu0 0.0
    %126 = vmatprep.subr.mxu0 0.0
    %127 = vmatpush1.msra.mxu0 0.0
    %128 = vmatprep.subr.mxu0 %v93
    %129 = vmatpush1.msra.mxu0 %v90
    %130 = vmatprep.subr.mxu0 0.0
    %131 = vmatpush2.msra.mxu0 0.0
    %132 = vmatprep.subr.mxu0 0.0
    %133 = vmatpush2.msra.mxu0 0.0
    %134 = vmatprep.subr.mxu0 0.0
    %135 = vmatpush2.msra.mxu0 0.0
    %136 = vmatprep.subr.mxu0 0.0
    %137 = vmatpush2.msra.mxu0 0.0
    %138 = vmatprep.subr.mxu0 0.0
    %139 = vmatpush2.msra.mxu0 0.0
    %140 = vmatprep.subr.mxu0 0.0
    %141 = vmatpush2.msra.mxu0 0.0
    %142 = vmatprep.subr.mxu0 0.0
    %143 = vmatpush2.msra.mxu0 0.0
    %144 = vmatprep.subr.mxu0 0.0
    %145 = vmatpush2.msra.mxu0 0.0
    %146 = vmatprep.subr.mxu0 0.0
    %147 = vmatpush2.msra.mxu0 0.0
    %148 = vmatprep.subr.mxu0 0.0
    %149 = vmatpush2.msra.mxu0 0.0
    %150 = vmatprep.subr.mxu0 0.0
    %151 = vmatpush2.msra.mxu0 0.0
    %152 = vmatprep.subr.mxu0 0.0
    %153 = vmatpush2.msra.mxu0 0.0
    %154 = vmatprep.subr.mxu0 0.0
    %155 = vmatpush2.msra.mxu0 0.0
    %156 = vmatprep.subr.mxu0 0.0
    %157 = vmatpush2.msra.mxu0 0.0
    %158 = vmatprep.subr.mxu0 0.0
    %159 = vmatpush2.msra.mxu0 0.0
    %160 = vmatprep.subr.mxu0 0.0
    %161 = vmatpush2.msra.mxu0 0.0
    %162 = vmatprep.mubr.f32.mxu0 0.0
    %163 = vmatmul.mubr.f32.gmra.mxu0 %v86
    %v164 = vpop.f32.mrf.mxu0
    %v165 = vadd.f32 %v72, %v164
    %v166 = vpop.f32.mrf.mxu0
    %v167 = vadd.f32 %v76, %v166
    %168 = vdwg.mxu0
    %169 = vmatprep.subr.mxu0 0.0
    %170 = vmatpush1.msra.mxu0 0.0
    %171 = vmatprep.subr.mxu0 0.0
    %172 = vmatpush1.msra.mxu0 0.0
    %173 = vmatprep.subr.mxu0 0.0
    %174 = vmatpush1.msra.mxu0 0.0
    %175 = vmatprep.subr.mxu0 0.0
    %176 = vmatpush1.msra.mxu0 0.0
    %177 = vmatprep.subr.mxu0 0.0
    %178 = vmatpush1.msra.mxu0 0.0
    %179 = vmatprep.subr.mxu0 0.0
    %180 = vmatpush1.msra.mxu0 0.0
    %181 = vmatprep.subr.mxu0 0.0
    %182 = vmatpush1.msra.mxu0 0.0
    %183 = vmatprep.subr.mxu0 0.0
    %184 = vmatpush1.msra.mxu0 0.0
    %185 = vmatprep.subr.mxu0 0.0
    %186 = vmatpush1.msra.mxu0 0.0
    %187 = vmatprep.subr.mxu0 0.0
    %188 = vmatpush1.msra.mxu0 0.0
    %189 = vmatprep.subr.mxu0 0.0
    %190 = vmatpush1.msra.mxu0 0.0
    %191 = vmatprep.subr.mxu0 0.0
    %192 = vmatpush1.msra.mxu0 0.0
    %193 = vmatprep.subr.mxu0 0.0
    %194 = vmatpush1.msra.mxu0 0.0
    %195 = vmatprep.subr.mxu0 0.0
    %196 = vmatpush1.msra.mxu0 0.0
    %197 = vmatprep.subr.mxu0 0.0
    %198 = vmatpush1.msra.mxu0 0.0
    %199 = vmatprep.subr.mxu0 0.0
    %200 = vmatpush1.msra.mxu0 %v96
    %201 = vmatprep.subr.mxu0 0.0
    %202 = vmatpush2.msra.mxu0 0.0
    %203 = vmatprep.subr.mxu0 0.0
    %204 = vmatpush2.msra.mxu0 0.0
    %205 = vmatprep.subr.mxu0 0.0
    %206 = vmatpush2.msra.mxu0 0.0
    %207 = vmatprep.subr.mxu0 0.0
    %208 = vmatpush2.msra.mxu0 0.0
    %209 = vmatprep.subr.mxu0 0.0
    %210 = vmatpush2.msra.mxu0 0.0
    %211 = vmatprep.subr.mxu0 0.0
    %212 = vmatpush2.msra.mxu0 0.0
    %213 = vmatprep.subr.mxu0 0.0
    %214 = vmatpush2.msra.mxu0 0.0
    %215 = vmatprep.subr.mxu0 0.0
    %216 = vmatpush2.msra.mxu0 0.0
    %217 = vmatprep.subr.mxu0 0.0
    %218 = vmatpush2.msra.mxu0 0.0
    %219 = vmatprep.subr.mxu0 0.0
    %220 = vmatpush2.msra.mxu0 0.0
    %221 = vmatprep.subr.mxu0 0.0
    %222 = vmatpush2.msra.mxu0 0.0
    %223 = vmatprep.subr.mxu0 0.0
    %224 = vmatpush2.msra.mxu0 0.0
    %225 = vmatprep.subr.mxu0 0.0
    %226 = vmatpush2.msra.mxu0 0.0
    %227 = vmatprep.subr.mxu0 0.0
    %228 = vmatpush2.msra.mxu0 0.0
    %229 = vmatprep.subr.mxu0 0.0
    %230 = vmatpush2.msra.mxu0 0.0
    %231 = vmatprep.subr.mxu0 0.0
    %232 = vmatpush2.msra.mxu0 0.0
    %233 = vmatprep.mubr.f32.mxu0 0.0
    %234 = vmatmul.mubr.f32.gmra.mxu0 %v86
    %v235 = vpop.f32.mrf.mxu0
    %v236 = vadd.f32 %v80, %v235
    %v237 = vpop.f32.mrf.mxu0
    %238 = vdwg.mxu0
    %v239 = vmax.f32 %v165, 0.0
    %v240 = vmax.f32 %v167, 0.0
    %v241 = vmax.f32 %v236, 0.0
    %v242 = vld [vmem:[%s4] sm:$0xff]
    %v243 = vld [vmem:[%s4 + $0x8] sm:$0xff]
    %v244 = vld [vmem:[%s4 + $0x10] sm:$0xff]
    %v245 = vld [vmem:[%s4 + $0x18] sm:$0xff]
    %v246 = vld [vmem:[%s4 + $0x20] sm:$0xff]
    %v247 = vld [vmem:[%s4 + $0x28] sm:$0xff]
    %v248 = vld [vmem:[%s4 + $0x30] sm:$0xff]
    %v249 = vld [vmem:[%s4 + $0x38] sm:$0xff]
    %v250 = vld [vmem:[%s4 + $0x40] sm:$0xff]
    %v251 = vld [vmem:[%s4 + $0x48] sm:$0xff]
    %v252 = vld [vmem:[%s4 + $0x50] sm:$0xff]
    %v253 = vld [vmem:[%s4 + $0x58] sm:$0xff]
    %v254 = vld [vmem:[%s4 + $0x60] sm:$0xff]
    %v255 = vld [vmem:[%s4 + $0x68] sm:$0xff]
    %v256 = vld [vmem:[%s4 + $0x70] sm:$0xff]
    %v257 = vld [vmem:[%s4 + $0x78] sm:$0xff]
    %v258 = vld [vmem:[%s4 + $0x80] sm:$0xff]
    %v259 = vld [vmem:[%s4 + $0x88] sm:$0xff]
    %v260 = vld [vmem:[%s4 + $0x90] sm:$0xff]
    %v261 = vld [vmem:[%s4 + $0x98] sm:$0xff]
    %v262 = vld [vmem:[%s4 + $0xa0] sm:$0xff]
    %v263 = vld [vmem:[%s4 + $0xa8] sm:$0xff]
    %v264 = vld [vmem:[%s4 + $0xb0] sm:$0xff]
    %v265 = vld [vmem:[%s4 + $0xb8] sm:$0xff]
    %v266 = vld [vmem:[%s4 + $0xc0] sm:$0xff]
    %v267 = vld [vmem:[%s4 + $0xc8] sm:$0xff]
    %v268 = vld [vmem:[%s4 + $0xd0] sm:$0xff]
    %v269 = vld [vmem:[%s4 + $0xd8] sm:$0xff]
    %v270 = vld [vmem:[%s4 + $0xe0] sm:$0xff]
    %v271 = vld [vmem:[%s4 + $0xe8] sm:$0xff]
    %v272 = vld [vmem:[%s4 + $0xf0] sm:$0xff]
    %v273 = vld [vmem:[%s4 + $0xf8] sm:$0xff]
    %v274 = vld [vmem:[%s4 + $0x100] sm:$0xff]
    %v275 = vld [vmem:[%s4 + $0x108] sm:$0xff]
    %v276 = vld [vmem:[%s4 + $0x110] sm:$0xff]
    %v277 = vld [vmem:[%s4 + $0x118] sm:$0xff]
    %v278 = vld [vmem:[%s4 + $0x120] sm:$0xff]
    %v279 = vld [vmem:[%s4 + $0x128] sm:$0xff]
    %v280 = vld [vmem:[%s4 + $0x130] sm:$0xff]
    %v281 = vld [vmem:[%s4 + $0x138] sm:$0xff]
    %v282 = vld [vmem:[%s4 + $0x140] sm:$0xff]
    %v283 = vld [vmem:[%s4 + $0x148] sm:$0xff]
    %v284 = vld [vmem:[%s4 + $0x150] sm:$0xff]
    %v285 = vld [vmem:[%s4 + $0x158] sm:$0xff]
    %v286 = vld [vmem:[%s4 + $0x160] sm:$0xff]
    %v287 = vld [vmem:[%s4 + $0x168] sm:$0xff]
    %v288 = vld [vmem:[%s4 + $0x170] sm:$0xff]
    %v289 = vld [vmem:[%s4 + $0x178] sm:$0xff]
    %v290 = vld [vmem:[%s5] sm:$0x1]
    %v292 = vlaneseq
    %v293 = vshrl.u32 %v292, 7
    %v294 = vsub.s32 0, %v293
    %v295 = vrot.slane %v290, %v294
    %297 = vmatprep.subr.mxu0 0.0
    %298 = vmatpush1.msra.mxu0 %v257
    %299 = vmatprep.subr.mxu0 0.0
    %300 = vmatpush1.msra.mxu0 %v256
    %301 = vmatprep.subr.mxu0 0.0
    %302 = vmatpush1.msra.mxu0 %v255
    %303 = vmatprep.subr.mxu0 0.0
    %304 = vmatpush1.msra.mxu0 %v254
    %305 = vmatprep.subr.mxu0 0.0
    %306 = vmatpush1.msra.mxu0 %v253
    %307 = vmatprep.subr.mxu0 0.0
    %308 = vmatpush1.msra.mxu0 %v252
    %309 = vmatprep.subr.mxu0 0.0
    %310 = vmatpush1.msra.mxu0 %v251
    %311 = vmatprep.subr.mxu0 0.0
    %312 = vmatpush1.msra.mxu0 %v250
    %313 = vmatprep.subr.mxu0 0.0
    %314 = vmatpush1.msra.mxu0 %v249
    %315 = vmatprep.subr.mxu0 0.0
    %316 = vmatpush1.msra.mxu0 %v248
    %317 = vmatprep.subr.mxu0 0.0
    %318 = vmatpush1.msra.mxu0 %v247
    %319 = vmatprep.subr.mxu0 0.0
    %320 = vmatpush1.msra.mxu0 %v246
    %321 = vmatprep.subr.mxu0 0.0
    %322 = vmatpush1.msra.mxu0 %v245
    %323 = vmatprep.subr.mxu0 0.0
    %324 = vmatpush1.msra.mxu0 %v244
    %325 = vmatprep.subr.mxu0 0.0
    %326 = vmatpush1.msra.mxu0 %v243
    %327 = vmatprep.subr.mxu0 0.0
    %328 = vmatpush1.msra.mxu0 %v242
    %329 = vmatprep.subr.mxu0 0.0
    %330 = vmatpush2.msra.mxu0 %v273
    %331 = vmatprep.subr.mxu0 0.0
    %332 = vmatpush2.msra.mxu0 %v272
    %333 = vmatprep.subr.mxu0 0.0
    %334 = vmatpush2.msra.mxu0 %v271
    %335 = vmatprep.subr.mxu0 0.0
    %336 = vmatpush2.msra.mxu0 %v270
    %337 = vmatprep.subr.mxu0 0.0
    %338 = vmatpush2.msra.mxu0 %v269
    %339 = vmatprep.subr.mxu0 0.0
    %340 = vmatpush2.msra.mxu0 %v268
    %341 = vmatprep.subr.mxu0 0.0
    %342 = vmatpush2.msra.mxu0 %v267
    %343 = vmatprep.subr.mxu0 0.0
    %344 = vmatpush2.msra.mxu0 %v266
    %345 = vmatprep.subr.mxu0 0.0
    %346 = vmatpush2.msra.mxu0 %v265
    %347 = vmatprep.subr.mxu0 0.0
    %348 = vmatpush2.msra.mxu0 %v264
    %349 = vmatprep.subr.mxu0 0.0
    %350 = vmatpush2.msra.mxu0 %v263
    %351 = vmatprep.subr.mxu0 0.0
    %352 = vmatpush2.msra.mxu0 %v262
    %353 = vmatprep.subr.mxu0 0.0
    %354 = vmatpush2.msra.mxu0 %v261
    %355 = vmatprep.subr.mxu0 0.0
    %356 = vmatpush2.msra.mxu0 %v260
    %357 = vmatprep.subr.mxu0 0.0
    %358 = vmatpush2.msra.mxu0 %v259
    %359 = vmatprep.subr.mxu0 0.0
    %360 = vmatpush2.msra.mxu0 %v258
    %361 = vmatprep.mubr.f32.mxu0 %v240
    %362 = vmatmul.mubr.f32.gmra.mxu0 %v239
    %v363 = vpop.f32.mrf.mxu0
    %v364 = vadd.f32 %v295, %v363
    %v365 = vpop.f32.mrf.mxu0
    %366 = vdwg.mxu0
    %367 = vmatprep.subr.mxu0 0.0
    %368 = vmatpush1.msra.mxu0 %v289
    %369 = vmatprep.subr.mxu0 0.0
    %370 = vmatpush1.msra.mxu0 %v288
    %371 = vmatprep.subr.mxu0 0.0
    %372 = vmatpush1.msra.mxu0 %v287
    %373 = vmatprep.subr.mxu0 0.0
    %374 = vmatpush1.msra.mxu0 %v286
    %375 = vmatprep.subr.mxu0 0.0
    %376 = vmatpush1.msra.mxu0 %v285
    %377 = vmatprep.subr.mxu0 0.0
    %378 = vmatpush1.msra.mxu0 %v284
    %379 = vmatprep.subr.mxu0 0.0
    %380 = vmatpush1.msra.mxu0 %v283
    %381 = vmatprep.subr.mxu0 0.0
    %382 = vmatpush1.msra.mxu0 %v282
    %383 = vmatprep.subr.mxu0 0.0
    %384 = vmatpush1.msra.mxu0 %v281
    %385 = vmatprep.subr.mxu0 0.0
    %386 = vmatpush1.msra.mxu0 %v280
    %387 = vmatprep.subr.mxu0 0.0
    %388 = vmatpush1.msra.mxu0 %v279
    %389 = vmatprep.subr.mxu0 0.0
    %390 = vmatpush1.msra.mxu0 %v278
    %391 = vmatprep.subr.mxu0 0.0
    %392 = vmatpush1.msra.mxu0 %v277
    %393 = vmatprep.subr.mxu0 0.0
    %394 = vmatpush1.msra.mxu0 %v276
    %395 = vmatprep.subr.mxu0 0.0
    %396 = vmatpush1.msra.mxu0 %v275
    %397 = vmatprep.subr.mxu0 0.0
    %398 = vmatpush1.msra.mxu0 %v274
    %399 = vmatprep.subr.mxu0 0.0
    %400 = vmatpush2.msra.mxu0 0.0
    %401 = vmatprep.subr.mxu0 0.0
    %402 = vmatpush2.msra.mxu0 0.0
    %403 = vmatprep.subr.mxu0 0.0
    %404 = vmatpush2.msra.mxu0 0.0
    %405 = vmatprep.subr.mxu0 0.0
    %406 = vmatpush2.msra.mxu0 0.0
    %407 = vmatprep.subr.mxu0 0.0
    %408 = vmatpush2.msra.mxu0 0.0
    %409 = vmatprep.subr.mxu0 0.0
    %410 = vmatpush2.msra.mxu0 0.0
    %411 = vmatprep.subr.mxu0 0.0
    %412 = vmatpush2.msra.mxu0 0.0
    %413 = vmatprep.subr.mxu0 0.0
    %414 = vmatpush2.msra.mxu0 0.0
    %415 = vmatprep.subr.mxu0 0.0
    %416 = vmatpush2.msra.mxu0 0.0
    %417 = vmatprep.subr.mxu0 0.0
    %418 = vmatpush2.msra.mxu0 0.0
    %419 = vmatprep.subr.mxu0 0.0
    %420 = vmatpush2.msra.mxu0 0.0
    %421 = vmatprep.subr.mxu0 0.0
    %422 = vmatpush2.msra.mxu0 0.0
    %423 = vmatprep.subr.mxu0 0.0
    %424 = vmatpush2.msra.mxu0 0.0
    %425 = vmatprep.subr.mxu0 0.0
    %426 = vmatpush2.msra.mxu0 0.0
    %427 = vmatprep.subr.mxu0 0.0
    %428 = vmatpush2.msra.mxu0 0.0
    %429 = vmatprep.subr.mxu0 0.0
    %430 = vmatpush2.msra.mxu0 0.0
    %431 = vmatprep.mubr.f32.mxu0 0.0
    %432 = vmatmul.mubr.f32.gmra.mxu0 %v241
    %v433 = vpop.f32.mrf.mxu0
    %v434 = vadd.f32 %v364, %v433
    %v435 = vpop.f32.mrf.mxu0
    %436 = vdwg.mxu0
    %v437 = vmax.f32 %v434, 0.0
    %v438 = vld [vmem:[%s6] sm:$0xff]
    %v439 = vld [vmem:[%s6 + $0x8] sm:$0xff]
    %v440 = vld [vmem:[%s6 + $0x10] sm:$0xff]
    %v441 = vld [vmem:[%s6 + $0x18] sm:$0xff]
    %v442 = vld [vmem:[%s6 + $0x20] sm:$0xff]
    %v443 = vld [vmem:[%s6 + $0x28] sm:$0xff]
    %v444 = vld [vmem:[%s6 + $0x30] sm:$0xff]
    %v445 = vld [vmem:[%s6 + $0x38] sm:$0xff]
    %v446 = vld [vmem:[%s6 + $0x40] sm:$0xff]
    %v447 = vld [vmem:[%s6 + $0x48] sm:$0xff]
    %v448 = vld [vmem:[%s6 + $0x50] sm:$0xff]
    %v449 = vld [vmem:[%s6 + $0x58] sm:$0xff]
    %v450 = vld [vmem:[%s6 + $0x60] sm:$0xff]
    %v451 = vld [vmem:[%s6 + $0x68] sm:$0xff]
    %v452 = vld [vmem:[%s6 + $0x70] sm:$0xff]
    %v453 = vld [vmem:[%s6 + $0x78] sm:$0xff]
    %v454 = vld [vmem:[%s7] sm:$0x1]
    %v456 = vlaneseq
    %v457 = vshrl.u32 %v456, 7
    %v458 = vsub.s32 0, %v457
    %v459 = vrot.slane %v454, %v458
    %461 = vmatprep.subr.mxu0 0.0
    %462 = vmatpush1.msra.mxu0 %v453
    %463 = vmatprep.subr.mxu0 0.0
    %464 = vmatpush1.msra.mxu0 %v452
    %465 = vmatprep.subr.mxu0 0.0
    %466 = vmatpush1.msra.mxu0 %v451
    %467 = vmatprep.subr.mxu0 0.0
    %468 = vmatpush1.msra.mxu0 %v450
    %469 = vmatprep.subr.mxu0 0.0
    %470 = vmatpush1.msra.mxu0 %v449
    %471 = vmatprep.subr.mxu0 0.0
    %472 = vmatpush1.msra.mxu0 %v448
    %473 = vmatprep.subr.mxu0 0.0
    %474 = vmatpush1.msra.mxu0 %v447
    %475 = vmatprep.subr.mxu0 0.0
    %476 = vmatpush1.msra.mxu0 %v446
    %477 = vmatprep.subr.mxu0 0.0
    %478 = vmatpush1.msra.mxu0 %v445
    %479 = vmatprep.subr.mxu0 0.0
    %480 = vmatpush1.msra.mxu0 %v444
    %481 = vmatprep.subr.mxu0 0.0
    %482 = vmatpush1.msra.mxu0 %v443
    %483 = vmatprep.subr.mxu0 0.0
    %484 = vmatpush1.msra.mxu0 %v442
    %485 = vmatprep.subr.mxu0 0.0
    %486 = vmatpush1.msra.mxu0 %v441
    %487 = vmatprep.subr.mxu0 0.0
    %488 = vmatpush1.msra.mxu0 %v440
    %489 = vmatprep.subr.mxu0 0.0
    %490 = vmatpush1.msra.mxu0 %v439
    %491 = vmatprep.subr.mxu0 0.0
    %492 = vmatpush1.msra.mxu0 %v438
    %493 = vmatprep.subr.mxu0 0.0
    %494 = vmatpush2.msra.mxu0 0.0
    %495 = vmatprep.subr.mxu0 0.0
    %496 = vmatpush2.msra.mxu0 0.0
    %497 = vmatprep.subr.mxu0 0.0
    %498 = vmatpush2.msra.mxu0 0.0
    %499 = vmatprep.subr.mxu0 0.0
    %500 = vmatpush2.msra.mxu0 0.0
    %501 = vmatprep.subr.mxu0 0.0
    %502 = vmatpush2.msra.mxu0 0.0
    %503 = vmatprep.subr.mxu0 0.0
    %504 = vmatpush2.msra.mxu0 0.0
    %505 = vmatprep.subr.mxu0 0.0
    %506 = vmatpush2.msra.mxu0 0.0
    %507 = vmatprep.subr.mxu0 0.0
    %508 = vmatpush2.msra.mxu0 0.0
    %509 = vmatprep.subr.mxu0 0.0
    %510 = vmatpush2.msra.mxu0 0.0
    %511 = vmatprep.subr.mxu0 0.0
    %512 = vmatpush2.msra.mxu0 0.0
    %513 = vmatprep.subr.mxu0 0.0
    %514 = vmatpush2.msra.mxu0 0.0
    %515 = vmatprep.subr.mxu0 0.0
    %516 = vmatpush2.msra.mxu0 0.0
    %517 = vmatprep.subr.mxu0 0.0
    %518 = vmatpush2.msra.mxu0 0.0
    %519 = vmatprep.subr.mxu0 0.0
    %520 = vmatpush2.msra.mxu0 0.0
    %521 = vmatprep.subr.mxu0 0.0
    %522 = vmatpush2.msra.mxu0 0.0
    %523 = vmatprep.subr.mxu0 0.0
    %524 = vmatpush2.msra.mxu0 0.0
    %525 = vmatprep.mubr.f32.mxu0 0.0
    %526 = vmatmul.mubr.f32.gmra.mxu0 %v437
    %v527 = vpop.f32.mrf.mxu0
    %v528 = vadd.f32 %v459, %v527
    %v529 = vpop.f32.mrf.mxu0
    %530 = vdwg.mxu0
    %v531 = vmul.f32 %v528, 0.5
    %v532 = vmul.f32 %v531, 1.442695
    %v533 = vpow.pop %v532
    %535 = vrot.lane.b32.xlu0 %v63, 2
    %v536 = vpop.permute.xlu0 %535
    %v538 = vmul.f32 %v533, %v536
    %540 = vrot.lane.b32.xlu0 %v538, 126
    %v541 = vpop.permute.xlu0 %540
    %v543 = vadd.f32 %v528, %v541
    %v544 = vld [vmem:[%s8] sm:$0x3]
    %546 = vset.pattern.permute.xlu0 0
    %547 = vperm.xlu0 %546, %v543
    %v548 = vpop.permute.xlu0 %547
    %v550 = vlaneseq
    %v551 = vshrl.u32 %v550, 7
    %v552 = vsub.s32 0, %v551
    %v553 = vrot.slane %v544, %v552
    %v554 = vmul.f32 %v548, %v553
    %555 = vset.pattern.permute.xlu0 1
    %556 = vperm.xlu0 %555, %v543
    %v557 = vpop.permute.xlu0 %556
    %v559 = vlaneseq
    %v560 = vshrl.u32 %v559, 7
    %v561 = vsub.s32 1, %v560
    %v562 = vrot.slane %v544, %v561
    %v563 = vmul.f32 %v557, %v562
    %v564 = vadd.f32 %v554, %v563
    %v565 = vld [vmem:[%s9] sm:$0x1]
    %v567 = vlaneseq
    %v568 = vshrl.u32 %v567, 7
    %v569 = vsub.s32 0, %v568
    %v570 = vrot.slane %v565, %v569
    %v572 = vadd.f32 %v564, %v570
    %v573 = vmax.f32 %v572, 0.0
    %v574 = vld [vmem:[#allocation2] sm:$0xff]
    %v575 = vld [vmem:[#allocation2 + $0x8] sm:$0xff]
    %v576 = vld [vmem:[#allocation2 + $0x10] sm:$0xff]
    %v577 = vld [vmem:[#allocation2 + $0x18] sm:$0xff]
    %v578 = vld [vmem:[#allocation2 + $0x20] sm:$0xff]
    %v579 = vld [vmem:[#allocation2 + $0x28] sm:$0xff]
    %v580 = vld [vmem:[#allocation2 + $0x30] sm:$0xff]
    %v581 = vld [vmem:[#allocation2 + $0x38] sm:$0xff]
    %v582 = vld [vmem:[#allocation2 + $0x40] sm:$0xff]
    %v583 = vld [vmem:[#allocation2 + $0x48] sm:$0xff]
    %v584 = vld [vmem:[#allocation2 + $0x50] sm:$0xff]
    %v585 = vld [vmem:[#allocation2 + $0x58] sm:$0xff]
    %v586 = vld [vmem:[#allocation2 + $0x60] sm:$0xff]
    %v587 = vld [vmem:[#allocation2 + $0x68] sm:$0xff]
    %v588 = vld [vmem:[#allocation2 + $0x70] sm:$0xff]
    %v589 = vld [vmem:[#allocation2 + $0x78] sm:$0xff]
    %v590 = vld [vmem:[#allocation2 + $0x80] sm:$0xff]
    %v591 = vld [vmem:[#allocation2 + $0x88] sm:$0xff]
    %v592 = vld [vmem:[#allocation2 + $0x90] sm:$0xff]
    %v593 = vld [vmem:[#allocation2 + $0x98] sm:$0xff]
    %v594 = vld [vmem:[#allocation2 + $0xa0] sm:$0xff]
    %v595 = vld [vmem:[#allocation2 + $0xa8] sm:$0xff]
    %v596 = vld [vmem:[#allocation2 + $0xb0] sm:$0xff]
    %v597 = vld [vmem:[#allocation2 + $0xb8] sm:$0xff]
    %v598 = vld [vmem:[#allocation2 + $0xc0] sm:$0xff]
    %v599 = vld [vmem:[#allocation2 + $0xc8] sm:$0xff]
    %v600 = vld [vmem:[#allocation2 + $0xd0] sm:$0xff]
    %v601 = vld [vmem:[#allocation2 + $0xd8] sm:$0xff]
    %v602 = vld [vmem:[#allocation2 + $0xe0] sm:$0xff]
    %v603 = vld [vmem:[#allocation2 + $0xe8] sm:$0xff]
    %v604 = vld [vmem:[#allocation2 + $0xf0] sm:$0xff]
    %v605 = vld [vmem:[#allocation2 + $0xf8] sm:$0xff]
    %v606 = vld [vmem:[#allocation2 + $0x100] sm:$0xff]
    %v607 = vld [vmem:[#allocation2 + $0x108] sm:$0xff]
    %v608 = vld [vmem:[#allocation2 + $0x110] sm:$0xff]
    %v609 = vld [vmem:[#allocation2 + $0x118] sm:$0xff]
    %v610 = vld [vmem:[#allocation2 + $0x120] sm:$0xff]
    %v611 = vld [vmem:[#allocation2 + $0x128] sm:$0xff]
    %v612 = vld [vmem:[#allocation2 + $0x130] sm:$0xff]
    %v613 = vld [vmem:[#allocation2 + $0x138] sm:$0xff]
    %v614 = vld [vmem:[#allocation2 + $0x140] sm:$0xff]
    %v615 = vld [vmem:[#allocation2 + $0x148] sm:$0xff]
    %v616 = vld [vmem:[#allocation2 + $0x150] sm:$0xff]
    %v617 = vld [vmem:[#allocation2 + $0x158] sm:$0xff]
    %v618 = vld [vmem:[#allocation2 + $0x160] sm:$0xff]
    %v619 = vld [vmem:[#allocation2 + $0x168] sm:$0xff]
    %v620 = vld [vmem:[#allocation2 + $0x170] sm:$0xff]
    %v621 = vld [vmem:[#allocation2 + $0x178] sm:$0xff]
    %v622 = vld [vmem:[%s11] sm:$0x7]
    %v624 = vlaneseq
    %v625 = vshrl.u32 %v624, 7
    %v626 = vsub.s32 0, %v625
    %v627 = vrot.slane %v622, %v626
    %v628 = vlaneseq
    %v629 = vshrl.u32 %v628, 7
    %v630 = vsub.s32 1, %v629
    %v631 = vrot.slane %v622, %v630
    %v632 = vlaneseq
    %v633 = vshrl.u32 %v632, 7
    %v634 = vsub.s32 2, %v633
    %v635 = vrot.slane %v622, %v634
    %639 = vmatprep.subr.mxu0 %v620
    %640 = vmatpush1.msra.mxu0 %v619
    %641 = vmatprep.subr.mxu0 %v617
    %642 = vmatpush1.msra.mxu0 %v616
    %643 = vmatprep.subr.mxu0 %v614
    %644 = vmatpush1.msra.mxu0 %v613
    %645 = vmatprep.subr.mxu0 %v611
    %646 = vmatpush1.msra.mxu0 %v610
    %647 = vmatprep.subr.mxu0 %v608
    %648 = vmatpush1.msra.mxu0 %v607
    %649 = vmatprep.subr.mxu0 %v605
    %650 = vmatpush1.msra.mxu0 %v604
    %651 = vmatprep.subr.mxu0 %v602
    %652 = vmatpush1.msra.mxu0 %v601
    %653 = vmatprep.subr.mxu0 %v599
    %654 = vmatpush1.msra.mxu0 %v598
    %655 = vmatprep.subr.mxu0 %v596
    %656 = vmatpush1.msra.mxu0 %v595
    %657 = vmatprep.subr.mxu0 %v593
    %658 = vmatpush1.msra.mxu0 %v592
    %659 = vmatprep.subr.mxu0 %v590
    %660 = vmatpush1.msra.mxu0 %v589
    %661 = vmatprep.subr.mxu0 %v587
    %662 = vmatpush1.msra.mxu0 %v586
    %663 = vmatprep.subr.mxu0 %v584
    %664 = vmatpush1.msra.mxu0 %v583
    %665 = vmatprep.subr.mxu0 %v581
    %666 = vmatpush1.msra.mxu0 %v580
    %667 = vmatprep.subr.mxu0 %v578
    %668 = vmatpush1.msra.mxu0 %v577
    %669 = vmatprep.subr.mxu0 %v575
    %670 = vmatpush1.msra.mxu0 %v574
    %671 = vmatprep.subr.mxu0 0.0
    %672 = vmatpush2.msra.mxu0 0.0
    %673 = vmatprep.subr.mxu0 0.0
    %674 = vmatpush2.msra.mxu0 0.0
    %675 = vmatprep.subr.mxu0 0.0
    %676 = vmatpush2.msra.mxu0 0.0
    %677 = vmatprep.subr.mxu0 0.0
    %678 = vmatpush2.msra.mxu0 0.0
    %679 = vmatprep.subr.mxu0 0.0
    %680 = vmatpush2.msra.mxu0 0.0
    %681 = vmatprep.subr.mxu0 0.0
    %682 = vmatpush2.msra.mxu0 0.0
    %683 = vmatprep.subr.mxu0 0.0
    %684 = vmatpush2.msra.mxu0 0.0
    %685 = vmatprep.subr.mxu0 0.0
    %686 = vmatpush2.msra.mxu0 0.0
    %687 = vmatprep.subr.mxu0 0.0
    %688 = vmatpush2.msra.mxu0 0.0
    %689 = vmatprep.subr.mxu0 0.0
    %690 = vmatpush2.msra.mxu0 0.0
    %691 = vmatprep.subr.mxu0 0.0
    %692 = vmatpush2.msra.mxu0 0.0
    %693 = vmatprep.subr.mxu0 0.0
    %694 = vmatpush2.msra.mxu0 0.0
    %695 = vmatprep.subr.mxu0 0.0
    %696 = vmatpush2.msra.mxu0 0.0
    %697 = vmatprep.subr.mxu0 0.0
    %698 = vmatpush2.msra.mxu0 0.0
    %699 = vmatprep.subr.mxu0 0.0
    %700 = vmatpush2.msra.mxu0 0.0
    %701 = vmatprep.subr.mxu0 0.0
    %702 = vmatpush2.msra.mxu0 0.0
    %703 = vmatprep.mubr.f32.mxu0 0.0
    %704 = vmatmul.mubr.f32.gmra.mxu0 %v573
    %v705 = vpop.f32.mrf.mxu0
    %v706 = vadd.f32 %v627, %v705
    %v707 = vpop.f32.mrf.mxu0
    %v708 = vadd.f32 %v631, %v707
    %709 = vdwg.mxu0
    %710 = vmatprep.subr.mxu0 0.0
    %711 = vmatpush1.msra.mxu0 %v621
    %712 = vmatprep.subr.mxu0 0.0
    %713 = vmatpush1.msra.mxu0 %v618
    %714 = vmatprep.subr.mxu0 0.0
    %715 = vmatpush1.msra.mxu0 %v615
    %716 = vmatprep.subr.mxu0 0.0
    %717 = vmatpush1.msra.mxu0 %v612
    %718 = vmatprep.subr.mxu0 0.0
    %719 = vmatpush1.msra.mxu0 %v609
    %720 = vmatprep.subr.mxu0 0.0
    %721 = vmatpush1.msra.mxu0 %v606
    %722 = vmatprep.subr.mxu0 0.0
    %723 = vmatpush1.msra.mxu0 %v603
    %724 = vmatprep.subr.mxu0 0.0
    %725 = vmatpush1.msra.mxu0 %v600
    %726 = vmatprep.subr.mxu0 0.0
    %727 = vmatpush1.msra.mxu0 %v597
    %728 = vmatprep.subr.mxu0 0.0
    %729 = vmatpush1.msra.mxu0 %v594
    %730 = vmatprep.subr.mxu0 0.0
    %731 = vmatpush1.msra.mxu0 %v591
    %732 = vmatprep.subr.mxu0 0.0
    %733 = vmatpush1.msra.mxu0 %v588
    %734 = vmatprep.subr.mxu0 0.0
    %735 = vmatpush1.msra.mxu0 %v585
    %736 = vmatprep.subr.mxu0 0.0
    %737 = vmatpush1.msra.mxu0 %v582
    %738 = vmatprep.subr.mxu0 0.0
    %739 = vmatpush1.msra.mxu0 %v579
    %740 = vmatprep.subr.mxu0 0.0
    %741 = vmatpush1.msra.mxu0 %v576
    %742 = vmatprep.subr.mxu0 0.0
    %743 = vmatpush2.msra.mxu0 0.0
    %744 = vmatprep.subr.mxu0 0.0
    %745 = vmatpush2.msra.mxu0 0.0
    %746 = vmatprep.subr.mxu0 0.0
    %747 = vmatpush2.msra.mxu0 0.0
    %748 = vmatprep.subr.mxu0 0.0
    %749 = vmatpush2.msra.mxu0 0.0
    %750 = vmatprep.subr.mxu0 0.0
    %751 = vmatpush2.msra.mxu0 0.0
    %752 = vmatprep.subr.mxu0 0.0
    %753 = vmatpush2.msra.mxu0 0.0
    %754 = vmatprep.subr.mxu0 0.0
    %755 = vmatpush2.msra.mxu0 0.0
    %756 = vmatprep.subr.mxu0 0.0
    %757 = vmatpush2.msra.mxu0 0.0
    %758 = vmatprep.subr.mxu0 0.0
    %759 = vmatpush2.msra.mxu0 0.0
    %760 = vmatprep.subr.mxu0 0.0
    %761 = vmatpush2.msra.mxu0 0.0
    %762 = vmatprep.subr.mxu0 0.0
    %763 = vmatpush2.msra.mxu0 0.0
    %764 = vmatprep.subr.mxu0 0.0
    %765 = vmatpush2.msra.mxu0 0.0
    %766 = vmatprep.subr.mxu0 0.0
    %767 = vmatpush2.msra.mxu0 0.0
    %768 = vmatprep.subr.mxu0 0.0
    %769 = vmatpush2.msra.mxu0 0.0
    %770 = vmatprep.subr.mxu0 0.0
    %771 = vmatpush2.msra.mxu0 0.0
    %772 = vmatprep.subr.mxu0 0.0
    %773 = vmatpush2.msra.mxu0 0.0
    %774 = vmatprep.mubr.f32.mxu0 0.0
    %775 = vmatmul.mubr.f32.gmra.mxu0 %v573
    %v776 = vpop.f32.mrf.mxu0
    %v777 = vadd.f32 %v635, %v776
    %v778 = vpop.f32.mrf.mxu0
    %779 = vdwg.mxu0
    %v780 = vmax.f32 %v706, 0.0
    %v781 = vmax.f32 %v708, 0.0
    %v782 = vmax.f32 %v777, 0.0
    %v783 = vld [vmem:[%s12] sm:$0xff]
    %v784 = vld [vmem:[%s12 + $0x8] sm:$0xff]
    %v785 = vld [vmem:[%s12 + $0x10] sm:$0xff]
    %v786 = vld [vmem:[%s12 + $0x18] sm:$0xff]
    %v787 = vld [vmem:[%s12 + $0x20] sm:$0xff]
    %v788 = vld [vmem:[%s12 + $0x28] sm:$0xff]
    %v789 = vld [vmem:[%s12 + $0x30] sm:$0xff]
    %v790 = vld [vmem:[%s12 + $0x38] sm:$0xff]
    %v791 = vld [vmem:[%s12 + $0x40] sm:$0xff]
    %v792 = vld [vmem:[%s12 + $0x48] sm:$0xff]
    %v793 = vld [vmem:[%s12 + $0x50] sm:$0xff]
    %v794 = vld [vmem:[%s12 + $0x58] sm:$0xff]
    %v795 = vld [vmem:[%s12 + $0x60] sm:$0xff]
    %v796 = vld [vmem:[%s12 + $0x68] sm:$0xff]
    %v797 = vld [vmem:[%s12 + $0x70] sm:$0xff]
    %v798 = vld [vmem:[%s12 + $0x78] sm:$0xff]
    %v799 = vld [vmem:[%s12 + $0x80] sm:$0xff]
    %v800 = vld [vmem:[%s12 + $0x88] sm:$0xff]
    %v801 = vld [vmem:[%s12 + $0x90] sm:$0xff]
    %v802 = vld [vmem:[%s12 + $0x98] sm:$0xff]
    %v803 = vld [vmem:[%s12 + $0xa0] sm:$0xff]
    %v804 = vld [vmem:[%s12 + $0xa8] sm:$0xff]
    %v805 = vld [vmem:[%s12 + $0xb0] sm:$0xff]
    %v806 = vld [vmem:[%s12 + $0xb8] sm:$0xff]
    %v807 = vld [vmem:[%s12 + $0xc0] sm:$0xff]
    %v808 = vld [vmem:[%s12 + $0xc8] sm:$0xff]
    %v809 = vld [vmem:[%s12 + $0xd0] sm:$0xff]
    %v810 = vld [vmem:[%s12 + $0xd8] sm:$0xff]
    %v811 = vld [vmem:[%s12 + $0xe0] sm:$0xff]
    %v812 = vld [vmem:[%s12 + $0xe8] sm:$0xff]
    %v813 = vld [vmem:[%s12 + $0xf0] sm:$0xff]
    %v814 = vld [vmem:[%s12 + $0xf8] sm:$0xff]
    %v815 = vld [vmem:[%s12 + $0x100] sm:$0xff]
    %v816 = vld [vmem:[%s12 + $0x108] sm:$0xff]
    %v817 = vld [vmem:[%s12 + $0x110] sm:$0xff]
    %v818 = vld [vmem:[%s12 + $0x118] sm:$0xff]
    %v819 = vld [vmem:[%s12 + $0x120] sm:$0xff]
    %v820 = vld [vmem:[%s12 + $0x128] sm:$0xff]
    %v821 = vld [vmem:[%s12 + $0x130] sm:$0xff]
    %v822 = vld [vmem:[%s12 + $0x138] sm:$0xff]
    %v823 = vld [vmem:[%s12 + $0x140] sm:$0xff]
    %v824 = vld [vmem:[%s12 + $0x148] sm:$0xff]
    %v825 = vld [vmem:[%s12 + $0x150] sm:$0xff]
    %v826 = vld [vmem:[%s12 + $0x158] sm:$0xff]
    %v827 = vld [vmem:[%s12 + $0x160] sm:$0xff]
    %v828 = vld [vmem:[%s12 + $0x168] sm:$0xff]
    %v829 = vld [vmem:[%s12 + $0x170] sm:$0xff]
    %v830 = vld [vmem:[%s12 + $0x178] sm:$0xff]
    %v831 = vld [vmem:[%s13] sm:$0x1]
    %v833 = vlaneseq
    %v834 = vshrl.u32 %v833, 7
    %v835 = vsub.s32 0, %v834
    %v836 = vrot.slane %v831, %v835
    %838 = vmatprep.subr.mxu0 0.0
    %839 = vmatpush1.msra.mxu0 %v798
    %840 = vmatprep.subr.mxu0 0.0
    %841 = vmatpush1.msra.mxu0 %v797
    %842 = vmatprep.subr.mxu0 0.0
    %843 = vmatpush1.msra.mxu0 %v796
    %844 = vmatprep.subr.mxu0 0.0
    %845 = vmatpush1.msra.mxu0 %v795
    %846 = vmatprep.subr.mxu0 0.0
    %847 = vmatpush1.msra.mxu0 %v794
    %848 = vmatprep.subr.mxu0 0.0
    %849 = vmatpush1.msra.mxu0 %v793
    %850 = vmatprep.subr.mxu0 0.0
    %851 = vmatpush1.msra.mxu0 %v792
    %852 = vmatprep.subr.mxu0 0.0
    %853 = vmatpush1.msra.mxu0 %v791
    %854 = vmatprep.subr.mxu0 0.0
    %855 = vmatpush1.msra.mxu0 %v790
    %856 = vmatprep.subr.mxu0 0.0
    %857 = vmatpush1.msra.mxu0 %v789
    %858 = vmatprep.subr.mxu0 0.0
    %859 = vmatpush1.msra.mxu0 %v788
    %860 = vmatprep.subr.mxu0 0.0
    %861 = vmatpush1.msra.mxu0 %v787
    %862 = vmatprep.subr.mxu0 0.0
    %863 = vmatpush1.msra.mxu0 %v786
    %864 = vmatprep.subr.mxu0 0.0
    %865 = vmatpush1.msra.mxu0 %v785
    %866 = vmatprep.subr.mxu0 0.0
    %867 = vmatpush1.msra.mxu0 %v784
    %868 = vmatprep.subr.mxu0 0.0
    %869 = vmatpush1.msra.mxu0 %v783
    %870 = vmatprep.subr.mxu0 0.0
    %871 = vmatpush2.msra.mxu0 %v814
    %872 = vmatprep.subr.mxu0 0.0
    %873 = vmatpush2.msra.mxu0 %v813
    %874 = vmatprep.subr.mxu0 0.0
    %875 = vmatpush2.msra.mxu0 %v812
    %876 = vmatprep.subr.mxu0 0.0
    %877 = vmatpush2.msra.mxu0 %v811
    %878 = vmatprep.subr.mxu0 0.0
    %879 = vmatpush2.msra.mxu0 %v810
    %880 = vmatprep.subr.mxu0 0.0
    %881 = vmatpush2.msra.mxu0 %v809
    %882 = vmatprep.subr.mxu0 0.0
    %883 = vmatpush2.msra.mxu0 %v808
    %884 = vmatprep.subr.mxu0 0.0
    %885 = vmatpush2.msra.mxu0 %v807
    %886 = vmatprep.subr.mxu0 0.0
    %887 = vmatpush2.msra.mxu0 %v806
    %888 = vmatprep.subr.mxu0 0.0
    %889 = vmatpush2.msra.mxu0 %v805
    %890 = vmatprep.subr.mxu0 0.0
    %891 = vmatpush2.msra.mxu0 %v804
    %892 = vmatprep.subr.mxu0 0.0
    %893 = vmatpush2.msra.mxu0 %v803
    %894 = vmatprep.subr.mxu0 0.0
    %895 = vmatpush2.msra.mxu0 %v802
    %896 = vmatprep.subr.mxu0 0.0
    %897 = vmatpush2.msra.mxu0 %v801
    %898 = vmatprep.subr.mxu0 0.0
    %899 = vmatpush2.msra.mxu0 %v800
    %900 = vmatprep.subr.mxu0 0.0
    %901 = vmatpush2.msra.mxu0 %v799
    %902 = vmatprep.mubr.f32.mxu0 %v781
    %903 = vmatmul.mubr.f32.gmra.mxu0 %v780
    %v904 = vpop.f32.mrf.mxu0
    %v905 = vadd.f32 %v836, %v904
    %v906 = vpop.f32.mrf.mxu0
    %907 = vdwg.mxu0
    %908 = vmatprep.subr.mxu0 0.0
    %909 = vmatpush1.msra.mxu0 %v830
    %910 = vmatprep.subr.mxu0 0.0
    %911 = vmatpush1.msra.mxu0 %v829
    %912 = vmatprep.subr.mxu0 0.0
    %913 = vmatpush1.msra.mxu0 %v828
    %914 = vmatprep.subr.mxu0 0.0
    %915 = vmatpush1.msra.mxu0 %v827
    %916 = vmatprep.subr.mxu0 0.0
    %917 = vmatpush1.msra.mxu0 %v826
    %918 = vmatprep.subr.mxu0 0.0
    %919 = vmatpush1.msra.mxu0 %v825
    %920 = vmatprep.subr.mxu0 0.0
    %921 = vmatpush1.msra.mxu0 %v824
    %922 = vmatprep.subr.mxu0 0.0
    %923 = vmatpush1.msra.mxu0 %v823
    %924 = vmatprep.subr.mxu0 0.0
    %925 = vmatpush1.msra.mxu0 %v822
    %926 = vmatprep.subr.mxu0 0.0
    %927 = vmatpush1.msra.mxu0 %v821
    %928 = vmatprep.subr.mxu0 0.0
    %929 = vmatpush1.msra.mxu0 %v820
    %930 = vmatprep.subr.mxu0 0.0
    %931 = vmatpush1.msra.mxu0 %v819
    %932 = vmatprep.subr.mxu0 0.0
    %933 = vmatpush1.msra.mxu0 %v818
    %934 = vmatprep.subr.mxu0 0.0
    %935 = vmatpush1.msra.mxu0 %v817
    %936 = vmatprep.subr.mxu0 0.0
    %937 = vmatpush1.msra.mxu0 %v816
    %938 = vmatprep.subr.mxu0 0.0
    %939 = vmatpush1.msra.mxu0 %v815
    %940 = vmatprep.subr.mxu0 0.0
    %941 = vmatpush2.msra.mxu0 0.0
    %942 = vmatprep.subr.mxu0 0.0
    %943 = vmatpush2.msra.mxu0 0.0
    %944 = vmatprep.subr.mxu0 0.0
    %945 = vmatpush2.msra.mxu0 0.0
    %946 = vmatprep.subr.mxu0 0.0
    %947 = vmatpush2.msra.mxu0 0.0
    %948 = vmatprep.subr.mxu0 0.0
    %949 = vmatpush2.msra.mxu0 0.0
    %950 = vmatprep.subr.mxu0 0.0
    %951 = vmatpush2.msra.mxu0 0.0
    %952 = vmatprep.subr.mxu0 0.0
    %953 = vmatpush2.msra.mxu0 0.0
    %954 = vmatprep.subr.mxu0 0.0
    %955 = vmatpush2.msra.mxu0 0.0
    %956 = vmatprep.subr.mxu0 0.0
    %957 = vmatpush2.msra.mxu0 0.0
    %958 = vmatprep.subr.mxu0 0.0
    %959 = vmatpush2.msra.mxu0 0.0
    %960 = vmatprep.subr.mxu0 0.0
    %961 = vmatpush2.msra.mxu0 0.0
    %962 = vmatprep.subr.mxu0 0.0
    %963 = vmatpush2.msra.mxu0 0.0
    %964 = vmatprep.subr.mxu0 0.0
    %965 = vmatpush2.msra.mxu0 0.0
    %966 = vmatprep.subr.mxu0 0.0
    %967 = vmatpush2.msra.mxu0 0.0
    %968 = vmatprep.subr.mxu0 0.0
    %969 = vmatpush2.msra.mxu0 0.0
    %970 = vmatprep.subr.mxu0 0.0
    %971 = vmatpush2.msra.mxu0 0.0
    %972 = vmatprep.mubr.f32.mxu0 0.0
    %973 = vmatmul.mubr.f32.gmra.mxu0 %v782
    %v974 = vpop.f32.mrf.mxu0
    %v975 = vadd.f32 %v905, %v974
    %v976 = vpop.f32.mrf.mxu0
    %977 = vdwg.mxu0
    %v978 = vmul.f32 %v975, 0.5
    %v979 = vtanh.pop %v978
    %v980 = vadd.f32 %v979, 1.0
    %v981 = vmul.f32 %v980, 0.5
    %982 = vrot.lane.b32.xlu0 %v543, 8
    %v983 = vpop.permute.xlu0 %982
    %986 = vrot.lane.b32.xlu0 %v528, 10
    %v987 = vpop.permute.xlu0 %986
    %vm989 = vcmask 64512
    %v990 = vsel %vm989, %v981, %v983
    %vm991 = vcmask 80896
    %v992 = vsel %vm991, %v990, %v987
    %vm993 = vcmask 113664
    %v994 = vsel %vm993, %v992, 0.0
    %995 = vst [vmem:[#allocation5] sm:$0xff] %v994
    // Predicated region
    $region62: #{tpu_custom_call.1} parent=1 // pred_check
      _
    $region63: #{tpu_custom_call.1} parent=1 // pred_check_branch
      %997 = sbr.rel (0) target = $region65
    $region64: #{tpu_custom_call.1} parent=1 // pred_region
      %s999 = ssub.s32 128, 128
      %1000 = vsyncadd [#allocation4], %s999
      %s1002 = sshll.u32 [#allocation5], 4
      %s1003 = int_to_ptr.vmem [resolvable:$true] %s1002
      %1005 = dma.vmem_to_hbm [thread:$0]  %s1003, 128, %s14, [#allocation4]
    $region65: #{tpu_custom_call.1} parent=1 // pred_fallthru
      _
    // Predicated region
    $region66: #{tpu_custom_call.1} parent=1 // pred_check
      _
    $region67: #{tpu_custom_call.1} parent=1 // pred_check_branch
      %1007 = sbr.rel (0) target = $region69
    $region68: #{tpu_custom_call.1} parent=1 // pred_region
      %1008 = dma.done [#allocation4], 128
    $region69: #{tpu_custom_call.1} parent=1 // pred_fallthru
      _
    %1009 = vsyncpa [#allocation3], 1
    %1010 = vsyncpa [#allocation4], 1

</llo_original>
